<compile_context>
chip_gen: v7x
topology: tpu7x:2x2x1
jax: 0.10.0
libtpu: 0.0.40
codegen_flags: <defaults>
</compile_context>

<pallas_src>
import functools

import jax
import jax.numpy as jnp
from jax.experimental import pallas as pl
from jax.experimental.pallas import tpu as pltpu


# ---------------------------------------------------------------------------
# Tuning constants (safe & fast across v5e / v6e / v7x).
# ---------------------------------------------------------------------------
_BLOCK_BUDGET = 4 * 1024 * 1024    # ~4 MiB/block -> ~16 MiB resident (2x in + 2x out):
                                   # fits v5e (with raised limit) and v7x's 64 MiB
                                   # physical VMEM, and shrinks the ~0.35us/step
                                   # pipeline overhead to a few % even at v7x HBM BW.
_MIN_GRID_STEPS = 8                # >= 3-4 steps per TensorCore on v7x (2 TCs).
_SHRINK_FLOOR = 128 * 1024         # never shard a tiny problem just for grid depth.
_VMEM_FLOOR = 32 * 1024 * 1024     # explicit scoped-VMEM request (raises v5e's 16 MiB).
_VMEM_CAP = 64 * 1024 * 1024       # never request beyond v7x's physical per-TC VMEM.


def _pad_to(v, m):
    return -(-v // m) * m


def _divisors_desc(n):
    return sorted((d for d in range(1, n + 1) if n % d == 0), reverse=True)


def _vmem_limit(needed_bytes):
    return int(min(max(needed_bytes, _VMEM_FLOOR), _VMEM_CAP))


def _copy_kernel(x_ref, o_ref):
    o_ref[...] = x_ref[...]


# ---------------------------------------------------------------------------
# Primary path: H*W % 128 == 0.
# ---------------------------------------------------------------------------
def _select_tiles_grouped(N, g, cpg, rows0, itemsize, pack):
    """Pick (n_tile, cpg_tile, rows_tile) for the lane-dense primary path."""
    # rows_tile candidates: sublane-pack multiples (zero VMEM padding) or full extent.
    row_divs = [d for d in _divisors_desc(rows0) if d % pack == 0 or d == rows0]
    cpg_divs = _divisors_desc(cpg)
    n_divs = _divisors_desc(N)

    def bb(nt, ct, rt):   # real VMEM bytes per block (incl. sublane padding)
        return nt * ct * _pad_to(rt, pack) * 128 * itemsize

    # (1) longest contiguous per-channel runs: largest rows_tile under budget.
    rt = next((d for d in row_divs if bb(1, cpg, d) <= _BLOCK_BUDGET), row_divs[-1])
    # (2) only shrink the channel dim if even the smallest rows tile blows budget.
    ct = cpg
    if bb(1, ct, rt) > _BLOCK_BUDGET:
        ct = next((d for d in cpg_divs if bb(1, d, rt) <= _BLOCK_BUDGET), 1)
    # (3) batch several samples per block while still under budget (big-block lever
    #     when a single per-(n, group) slab is small).
    nt = next((d for d in n_divs if bb(d, ct, rt) <= _BLOCK_BUDGET), 1)

    # (4) pipeline-depth guard: keep >= _MIN_GRID_STEPS grid steps so the DMA
    #     double-buffer (and v7x's 2-TC split) overlaps, but never shard tiny
    #     problems and never shrink contiguous runs below 512 elements.
    def steps(nt_, ct_, rt_):
        return (N // nt_) * g * (cpg // ct_) * (rows0 // rt_)

    while steps(nt, ct, rt) < _MIN_GRID_STEPS and bb(nt, ct, rt) > _SHRINK_FLOOR:
        if nt > 1:
            nt = next(d for d in n_divs if d < nt)
            continue
        smaller_rt = [d for d in row_divs if d < rt and d >= 4]
        if smaller_rt:
            rt = smaller_rt[0]          # descending -> largest divisor below rt
            continue
        smaller_ct = [d for d in cpg_divs if d < ct]
        if smaller_ct:
            ct = smaller_ct[0]
            continue
        break
    return nt, ct, rt


def _channel_shuffle_grouped(x, N, C, H, W, g):
    cpg = C // g
    HW = H * W
    rows0 = HW // 128
    itemsize = jnp.dtype(x.dtype).itemsize
    pack = max(1, 32 // itemsize)       # sublane pack: 8 f32 / 16 bf16 / 32 int8

    n_tile, cpg_t, rows_t = _select_tiles_grouped(N, g, cpg, rows0, itemsize, pack)
    n_b = N // n_tile
    n_j = cpg // cpg_t
    n_t = rows0 // rows_t

    block_bytes = n_tile * cpg_t * _pad_to(rows_t, pack) * 128 * itemsize
    vmem_limit = _vmem_limit(4 * block_bytes + (2 << 20))   # 2x double-buffered in+out

    x5 = x.reshape(N, g, cpg, rows0, 128)                    # free, contiguous reshape

    out5 = pl.pallas_call(
        _copy_kernel,
        out_shape=jax.ShapeDtypeStruct((N, cpg, g, rows0, 128), x.dtype),
        grid_spec=pltpu.PrefetchScalarGridSpec(
            num_scalar_prefetch=0,
            grid=(n_b, g, n_j, n_t),
            in_specs=[
                pl.BlockSpec((n_tile, None, cpg_t, rows_t, 128),
                             lambda b, i, jt, t: (b, i, jt, t, 0)),
            ],
            out_specs=pl.BlockSpec((n_tile, cpg_t, None, rows_t, 128),
                                   lambda b, i, jt, t: (b, jt, i, t, 0)),
        ),
        compiler_params=pltpu.CompilerParams(
            dimension_semantics=("parallel", "parallel", "parallel", "parallel"),
            vmem_limit_bytes=vmem_limit),
    )(x5)

    # (N, C/g, g, HW/128, 128) -> (N, C, H, W): free, contiguous reshape.
    return out5.reshape(N, C, H, W)


# ---------------------------------------------------------------------------
# Fallback path: H*W not a multiple of 128 (ragged spatial extent).
# ---------------------------------------------------------------------------
def _swap_kernel(g, x_ref, o_ref):
    # x_ref: (g, cpg_t, HW); o_ref: (cpg_t, g, HW).
    # Static unroll over the (small) group count: each step is a dense
    # (cpg_t, HW) read and a single-sublane-indexed store; the relayout forced
    # by the ragged HW stays on-chip and overlaps with the block DMAs.
    for i in range(g):
        o_ref[:, i, :] = x_ref[i]


def _channel_shuffle_swap(x, N, C, H, W, g):
    cpg = C // g
    HW = H * W
    itemsize = jnp.dtype(x.dtype).itemsize
    pack = max(1, 32 // itemsize)
    HW_pad = _pad_to(HW, 128)

    def pair_bytes(ct):   # in-block + out-block VMEM bytes (incl. sublane padding)
        in_b = g * _pad_to(ct, pack) * HW_pad * itemsize
        out_b = ct * _pad_to(g, pack) * HW_pad * itemsize
        return in_b + out_b

    budget_pair = 8 * 1024 * 1024
    # cpg tile must be a sublane-pack multiple (legality + density) or full cpg.
    cpg_divs = [d for d in _divisors_desc(cpg) if d % pack == 0 or d == cpg]
    ct = next((d for d in cpg_divs if pair_bytes(d) <= budget_pair), cpg_divs[-1])

    # Mild pipeline-depth guard (same rationale as the primary path).
    while N * (cpg // ct) < _MIN_GRID_STEPS and pair_bytes(ct) > _SHRINK_FLOOR:
        smaller = [d for d in cpg_divs if d < ct]
        if not smaller:
            break
        ct = smaller[0]

    n_j = cpg // ct
    vmem_limit = _vmem_limit(2 * pair_bytes(ct) + (2 << 20))

    x4 = x.reshape(N, g, cpg, HW)                            # free, contiguous reshape

    out4 = pl.pallas_call(
        functools.partial(_swap_kernel, g),
        out_shape=jax.ShapeDtypeStruct((N, cpg, g, HW), x.dtype),
        grid_spec=pltpu.PrefetchScalarGridSpec(
            num_scalar_prefetch=0,
            grid=(N, n_j),
            in_specs=[
                pl.BlockSpec((None, g, ct, HW), lambda n, jt: (n, 0, jt, 0)),
            ],
            out_specs=pl.BlockSpec((None, ct, g, HW), lambda n, jt: (n, jt, 0, 0)),
        ),
        compiler_params=pltpu.CompilerParams(
            dimension_semantics=("parallel", "parallel"),
            vmem_limit_bytes=vmem_limit),
    )(x4)

    # (N, C/g, g, HW) -> (N, C, H, W): free, contiguous reshape.
    return out4.reshape(N, C, H, W)


# ---------------------------------------------------------------------------
# Public wrapper (matches the PyTorch module's forward).
# ---------------------------------------------------------------------------
@functools.partial(jax.jit, static_argnames=("groups",))
def channel_shuffle(x, *, groups):
    """ChannelShuffle forward:
    view(N,g,C/g,H,W).permute(0,2,1,3,4).contiguous().view(N,C,H,W)."""
    N, C, H, W = x.shape
    g = int(groups)
    assert C % g == 0, (
        "Incompatible group size {} for input channel {}".format(g, C))
    if g == 1 or g == C:
        return x                         # permutation is the identity
    if (H * W) % 128 == 0:
        return _channel_shuffle_grouped(x, N, C, H, W, g)
    return _channel_shuffle_swap(x, N, C, H, W, g)


def channel_shuffle_ref(x, groups):
    N, C, H, W = x.shape
    return (x.reshape(N, groups, C // groups, H, W)
             .transpose(0, 2, 1, 3, 4)
             .reshape(N, C, H, W))


if __name__ == "__main__":
    key = jax.random.PRNGKey(0)
    k1, k2, k3 = jax.random.split(key, 3)

    # Primary (lane-dense) path: NCHW input matching the PyTorch module; groups=2.
    x = jax.random.normal(k1, (2, 4, 16, 16), dtype=jnp.float32)
    out = jax.block_until_ready(channel_shuffle(x, groups=2))
    ref = channel_shuffle_ref(x, 2)
    assert out.shape == x.shape and out.dtype == x.dtype
    assert bool(jnp.array_equal(out, ref)), "primary (lane-dense) path mismatch"

    # Ragged-spatial fallback path (H*W = 25, not a multiple of 128).
    x2 = jax.random.normal(k2, (2, 6, 5, 5), dtype=jnp.float32)
    out2 = jax.block_until_ready(channel_shuffle(x2, groups=3))
    ref2 = channel_shuffle_ref(x2, 3)
    assert out2.shape == x2.shape and out2.dtype == x2.dtype
    assert bool(jnp.array_equal(out2, ref2)), "fallback (swap) path mismatch"

    # Primary path again with multi-sample blocks + grid-depth guard exercised.
    x3 = jax.random.normal(k3, (4, 16, 64, 64), dtype=jnp.float32)
    out3 = jax.block_until_ready(channel_shuffle(x3, groups=4))
    ref3 = channel_shuffle_ref(x3, 4)
    assert out3.shape == x3.shape and out3.dtype == x3.dtype
    assert bool(jnp.array_equal(out3, ref3)), "primary (batched-block) path mismatch"

    print("KERNEL_OK")
</pallas_src>

<mosaic_0001>
module attributes {stable_mosaic.version = 11 : i64} {
  func.func @_copy_kernel(%arg0: i32, %arg1: i32, %arg2: i32, %arg3: i32, %arg4: memref<2x1x2x2x128xf32, #tpu.memory_space<vmem>>, %arg5: memref<2x2x1x2x128xf32, #tpu.memory_space<vmem>>) attributes {dimension_semantics = [#tpu.dimension_semantics<parallel>, #tpu.dimension_semantics<parallel>, #tpu.dimension_semantics<parallel>, #tpu.dimension_semantics<parallel>], iteration_bounds = array<i64: 1, 2, 1, 1>, scalar_prefetch = 0 : i64, scratch_operands = 0 : i64, tpu.core_type = #tpu.core_type<tc>, window_params = [{transform_indices = @transform_0, window_bounds = array<i64: 2, 1, 2, 2, 128>}, {transform_indices = @transform_1, window_bounds = array<i64: 2, 2, 1, 2, 128>}]} {
    %c0 = arith.constant 0 : index
    %c0_0 = arith.constant 0 : index
    %c0_1 = arith.constant 0 : index
    %c0_2 = arith.constant 0 : index
    %c0_3 = arith.constant 0 : index
    %0 = vector.load %arg4[%c0, %c0_0, %c0_1, %c0_2, %c0_3] : memref<2x1x2x2x128xf32, #tpu.memory_space<vmem>>, vector<2x1x2x2x128xf32>
    %1 = vector.shape_cast %0 : vector<2x1x2x2x128xf32> to vector<2x2x2x128xf32>
    %c0_4 = arith.constant 0 : index
    %c0_5 = arith.constant 0 : index
    %c0_6 = arith.constant 0 : index
    %c0_7 = arith.constant 0 : index
    %c0_8 = arith.constant 0 : index
    %2 = vector.load %arg5[%c0_4, %c0_5, %c0_6, %c0_7, %c0_8] : memref<2x2x1x2x128xf32, #tpu.memory_space<vmem>>, vector<2x2x1x2x128xf32>
    %3 = vector.shape_cast %2 : vector<2x2x1x2x128xf32> to vector<2x2x2x128xf32>
    %4 = vector.shape_cast %1 : vector<2x2x2x128xf32> to vector<2x2x1x2x128xf32>
    tpu.vector_store %arg5[%c0_4, %c0_5, %c0_6, %c0_7, %c0_8], %4 {strides = array<i32>} : memref<2x2x1x2x128xf32, #tpu.memory_space<vmem>>, vector<2x2x1x2x128xf32>,
    return
  }
  func.func @transform_0(%arg0: i32, %arg1: i32, %arg2: i32, %arg3: i32) -> (i32, i32, i32, i32, i32) {
    %c0_i32 = arith.constant 0 : i32
    %c0_i32_0 = arith.constant 0 : i32
    return %arg0, %arg1, %arg2, %arg3, %c0_i32 : i32, i32, i32, i32, i32
  }
  func.func @transform_1(%arg0: i32, %arg1: i32, %arg2: i32, %arg3: i32) -> (i32, i32, i32, i32, i32) {
    %c0_i32 = arith.constant 0 : i32
    %c0_i32_0 = arith.constant 0 : i32
    return %arg0, %arg2, %arg1, %arg3, %c0_i32 : i32, i32, i32, i32, i32
  }
}

</mosaic_0001>

<llo_original>
// kernel: channel_shuffle.1
$region0: #{channel_shuffle.1}
  #allocation0 [shape = 'u32[]', space=smem, size = 0x4, offset = 0x4, fixed_abs, tag = 'smem constant byte address 0x4 - core index']
  #allocation1 [shape = 'u32[144,128]{1,0:T(1,128)}', space=vmem, size = 0x12000, scoped, tag = 'internal scratch']
  %s0 = inlined_call_operand.vmem [shape: f32[2,2,2,2,128], index: 0, kind: input, shape index: {}]
  %s1 = inlined_call_operand.vmem [shape: f32[2,2,2,2,128], index: 1, kind: output, shape index: {}]
  %s2 = sld [smem:[#allocation0]]
  $region115: #{channel_shuffle.1} parent=0
    _
  %s4 = ssub.s32 1, %s2
  %s5 = scalar_select 0, %s4, %s2
  $region1: #{channel_shuffle.1} parent=0
    #allocation2 [shape = 'u8[8192]{0}', space=vmem, size = 0x2000, scoped, tag = 'input window, operand 0']
    #allocation3 [shape = 'u8[8192]{0}', space=vmem, size = 0x2000, scoped, tag = 'output window, operand 0']
    loop: start=0, step=1, limit=4
    $region2: #{channel_shuffle.1} parent=1 // loop_pre_header
      _
    $region3: #{channel_shuffle.1} parent=1 // loop_header
      %s7 = sphi 0, %s11
      %p8 = scmp.ge.s32.totalorder %s7, 4
      %s14 = sphi 0, %s40
      %s15 = sphi 0, %s36
      %s16 = sphi 0, %s32
      %s17 = sphi 0, %s28
      %s18 = sphi 0, %s14
      %s19 = sphi 0, %s15
      %s20 = sphi 0, %s16
      %s21 = sphi 0, %s17
      %s22 = sphi 0, %s18
      %s23 = sphi 0, %s19
      %s24 = sphi 0, %s20
      %s25 = sphi 0, %s21
      %s49 = sphi 0, %s51
      %s52 = sphi 0, %s49
      %s53 = sphi 0, %s52
      %s69 = sphi 0, %s53
      %s81 = sphi 0, %s83
      %s84 = sphi 0, %s81
      %s85 = sphi 0, %s84
      %s101 = sphi 0, %s85
    $region4: #{channel_shuffle.1} parent=1 // loop_header_branch
      %10 = sbr.rel (%p8) target = $region8
    $region5: #{channel_shuffle.1} parent=1 // loop_body
      %s12 = ssub.s32 %s7, 1
      %s13 = ssub.s32 %s7, 2
      %s26 = sadd.s32 1, %s17
      %p27 = scmp.ge.s32.totalorder %s26, 1
      %s28 = scalar_select %p27, 0, %s26
      %s29 = sadd.s32 1, %s16
      %s30 = scalar_select %p27, %s29, %s16
      %p31 = scmp.ge.s32.totalorder %s30, 1
      %s32 = scalar_select %p31, 0, %s30
      %s33 = sadd.s32 1, %s15
      %s34 = scalar_select %p31, %s33, %s15
      %p35 = scmp.ge.s32.totalorder %s34, 2
      %s36 = scalar_select %p35, 0, %s34
      %s37 = sadd.s32 1, %s14
      %s38 = scalar_select %p35, %s37, %s14
      %p39 = scmp.ge.s32.totalorder %s38, 1
      %s40 = scalar_select %p39, 0, %s38
      %s41 = ssub.s32 %s14, %s40
      %s42 = ssub.s32 %s15, %s36
      %s43 = sor.u32 %s41, %s42
      %s44 = ssub.s32 %s16, %s32
      %s45 = sor.u32 %s43, %s44
      %s46 = ssub.s32 %s17, %s28
      %s47 = sor.u32 %s45, %s46
      %p48 = scmp.eq.s32.totalorder %s47, 0
      %s50 = sadd.s32 %s49, 1
      %s51 = scalar_select %p48, %s49, %s50
      %p54 = pneg %p48
      %p55 = scmp.eq.s32.totalorder %s7, 1
      %p56 = por %p54, %p55
      %p57 = scmp.ne.s32.totalorder %s49, %s52
      %p58 = scmp.eq.s32.totalorder %s7, 0
      %p59 = por %p57, %p58
      %p60 = scmp.ne.s32.totalorder %s49, %s52
      %p61 = scmp.eq.s32.totalorder %s12, 1
      %p62 = por %p60, %p61
      %p63 = scmp.ne.s32.totalorder %s52, %s53
      %p64 = scmp.eq.s32.totalorder %s12, 0
      %p65 = por %p63, %p64
      %p66 = scmp.ne.s32.totalorder %s52, %s53
      %p67 = scmp.eq.s32.totalorder %s13, 1
      %p68 = por %p66, %p67
      %p70 = scmp.ne.s32.totalorder %s53, %s69
      %p71 = scmp.eq.s32.totalorder %s13, 0
      %p72 = por %p70, %p71
      %s73 = ssub.s32 %s14, %s40
      %s74 = ssub.s32 %s16, %s32
      %s75 = sor.u32 %s73, %s74
      %s76 = ssub.s32 %s15, %s36
      %s77 = sor.u32 %s75, %s76
      %s78 = ssub.s32 %s17, %s28
      %s79 = sor.u32 %s77, %s78
      %p80 = scmp.eq.s32.totalorder %s79, 0
      %s82 = sadd.s32 %s81, 1
      %s83 = scalar_select %p80, %s81, %s82
      %p86 = pneg %p80
      %p87 = scmp.eq.s32.totalorder %s7, 1
      %p88 = por %p86, %p87
      %p89 = scmp.ne.s32.totalorder %s81, %s84
      %p90 = scmp.eq.s32.totalorder %s7, 0
      %p91 = por %p89, %p90
      %p92 = scmp.ne.s32.totalorder %s81, %s84
      %p93 = scmp.eq.s32.totalorder %s12, 1
      %p94 = por %p92, %p93
      %p95 = scmp.ne.s32.totalorder %s84, %s85
      %p96 = scmp.eq.s32.totalorder %s12, 0
      %p97 = por %p95, %p96
      %p98 = scmp.ne.s32.totalorder %s84, %s85
      %p99 = scmp.eq.s32.totalorder %s13, 1
      %p100 = por %p98, %p99
      %p102 = scmp.ne.s32.totalorder %s85, %s101
      %p103 = scmp.eq.s32.totalorder %s13, 0
      %p104 = por %p102, %p103
      %p105 = scmp.le.s32.totalorder 1, %s7
      %p106 = scmp.lt.s32.totalorder %s7, 3
      %p107 = pnand %p105, %p106
      %p108 = pneg %p107
      // Predicated region
      $region9: #{channel_shuffle.1} parent=5 // pred_check
        _
      $region10: #{channel_shuffle.1} parent=5 // pred_check_branch
        %110 = sbr.rel (%p107) target = $region12
      $region11: #{channel_shuffle.1} parent=5 // pred_region
        %s111 = ssub.s32 %s7, 1
      $region12: #{channel_shuffle.1} parent=5 // pred_fallthru
        _
      %p112 = scmp.lt.s32.totalorder %s7, 2
      // Predicated region
      $region13: #{channel_shuffle.1} parent=5 // pred_check
        %p113 = pneg %p112
      $region14: #{channel_shuffle.1} parent=5 // pred_check_branch
        %115 = sbr.rel (%p113) target = $region16
      $region15: #{channel_shuffle.1} parent=5 // pred_region
        // Predicated region
        $region17: #{channel_shuffle.1} parent=15 // pred_check
          %p116 = pneg %p59
        $region18: #{channel_shuffle.1} parent=15 // pred_check_branch
          %118 = sbr.rel (%p116) target = $region20
        $region19: #{channel_shuffle.1} parent=15 // pred_region
          %s119 = sand.u32 %s49, 1
          %s120 = sand.u32 %s49, 1
          %s121 = smul.addr %s120, 8
          %s122 = scalar_lea.vmem [#allocation2], %s121
          %s123 = smul.u32 2, %s14
          %s124 = smul.u32 2, %s16
          %s125 = sadd.s32 %s17, %s124
          %s126 = smul.addr %s15, 2
          %s127 = sadd.s32 %s125, %s126
          %s128 = smul.addr %s123, 4
          %s129 = sadd.s32 %s127, %s128
          %s130 = smul.addr %s129, 2
          %s131 = scalar_lea.vmem %s0, %s130
          // Predicated region
          $region21: #{channel_shuffle.1} parent=19 // pred_check
            _
          $region22: #{channel_shuffle.1} parent=19 // pred_check_branch
            %133 = sbr.rel (0) target = $region24
          $region23: #{channel_shuffle.1} parent=19 // pred_region
            // Predicated region
            $region25: #{channel_shuffle.1} parent=23 // pred_check
              _
            $region26: #{channel_shuffle.1} parent=23 // pred_check_branch
              %135 = sbr.rel target = $region28
            $region27: #{channel_shuffle.1} parent=23 // pred_region
              // Predicated region
              $region40: #{channel_shuffle.1} parent=27 // pred_check
                _
              $region41: #{channel_shuffle.1} parent=27 // pred_check_branch
                %156 = sbr.rel (0) target = $region43
              $region42: #{channel_shuffle.1} parent=27 // pred_region
                loop: start=0, step=1, limit=1
                $region44: #{channel_shuffle.1} parent=42 // loop_pre_header
                  _
                $region45: #{channel_shuffle.1} parent=42 // loop_header
                  %s158 = sphi 0, %s162
                  %p159 = scmp.ge.s32.totalorder %s158, 1
                  %s163 = sphi %s131, %s131
                  %s164 = sphi %s122, %s122
                $region46: #{channel_shuffle.1} parent=42 // loop_header_branch
                  %161 = sbr.rel (%p159) target = $region50
                $region47: #{channel_shuffle.1} parent=42 // loop_body
                  _
                $region48: #{channel_shuffle.1} parent=42 // loop_footer
                  %s162 = sadd.s32 1, %s158
                $region49: #{channel_shuffle.1} parent=42 // loop_footer_branch
                  %157 = sbr.rel target = $region45
                $region50: #{channel_shuffle.1} parent=42 // loop_exit
                  _
                loop: start=0, step=1, limit=1
                $region51: #{channel_shuffle.1} parent=42 // loop_pre_header
                  _
                $region52: #{channel_shuffle.1} parent=42 // loop_header
                  %s167 = sphi 0, %s171
                  %p168 = scmp.ge.s32.totalorder %s167, 1
                  %s172 = sphi %s131, %s131
                  %s173 = sphi %s122, %s122
                $region53: #{channel_shuffle.1} parent=42 // loop_header_branch
                  %170 = sbr.rel (%p168) target = $region57
                $region54: #{channel_shuffle.1} parent=42 // loop_body
                  %v174 = vld [vmem:[%s172] sm:$0x3]
                  %175 = vst [vmem:[%s173] sm:$0x3] %v174
                  %v176 = vld [vmem:[%s172 + $0x2] sm:$0x3]
                  %177 = vst [vmem:[%s173 + $0x2] sm:$0x3] %v176
                  %v178 = vld [vmem:[%s172 + $0x8] sm:$0x3]
                  %179 = vst [vmem:[%s173 + $0x4] sm:$0x3] %v178
                  %v180 = vld [vmem:[%s172 + $0xa] sm:$0x3]
                  %181 = vst [vmem:[%s173 + $0x6] sm:$0x3] %v180
                $region55: #{channel_shuffle.1} parent=42 // loop_footer
                  %s171 = sadd.s32 1, %s167
                $region56: #{channel_shuffle.1} parent=42 // loop_footer_branch
                  %166 = sbr.rel target = $region52
                $region57: #{channel_shuffle.1} parent=42 // loop_exit
                  _
              $region43: #{channel_shuffle.1} parent=27 // pred_fallthru
                _
            $region28: #{channel_shuffle.1} parent=23 // pred_fallthru
              _
            // Predicated region
            $region29: #{channel_shuffle.1} parent=23 // pred_check
              _
            $region30: #{channel_shuffle.1} parent=23 // pred_check_branch
              %137 = sbr.rel (0) target = $region32
            $region31: #{channel_shuffle.1} parent=23 // pred_region
              loop: start=0, step=1, limit=1
              $region33: #{channel_shuffle.1} parent=31 // loop_pre_header
                _
              $region34: #{channel_shuffle.1} parent=31 // loop_header
                %s140 = sphi 0, %s144
                %p141 = scmp.ge.s32.totalorder %s140, 1
                %s145 = sphi %s131, %s131
                %s146 = sphi %s122, %s122
              $region35: #{channel_shuffle.1} parent=31 // loop_header_branch
                %143 = sbr.rel (%p141) target = $region39
              $region36: #{channel_shuffle.1} parent=31 // loop_body
                %v147 = vld [vmem:[%s145] sm:$0x3]
                %148 = vst [vmem:[%s146] sm:$0x3] %v147
                %v149 = vld [vmem:[%s145 + $0x2] sm:$0x3]
                %150 = vst [vmem:[%s146 + $0x2] sm:$0x3] %v149
                %v151 = vld [vmem:[%s145 + $0x8] sm:$0x3]
                %152 = vst [vmem:[%s146 + $0x4] sm:$0x3] %v151
                %v153 = vld [vmem:[%s145 + $0xa] sm:$0x3]
                %154 = vst [vmem:[%s146 + $0x6] sm:$0x3] %v153
              $region37: #{channel_shuffle.1} parent=31 // loop_footer
                %s144 = sadd.s32 1, %s140
              $region38: #{channel_shuffle.1} parent=31 // loop_footer_branch
                %139 = sbr.rel target = $region34
              $region39: #{channel_shuffle.1} parent=31 // loop_exit
                _
            $region32: #{channel_shuffle.1} parent=23 // pred_fallthru
              _
          $region24: #{channel_shuffle.1} parent=19 // pred_fallthru
            _
          %182 = vnop
        $region20: #{channel_shuffle.1} parent=15 // pred_fallthru
          _
      $region16: #{channel_shuffle.1} parent=5 // pred_fallthru
        _
      %p183 = scmp.le.s32.totalorder 1, %s7
      %p184 = scmp.lt.s32.totalorder %s7, 3
      %p185 = pnand %p183, %p184
      %p186 = pneg %p185
      // Predicated region
      $region58: #{channel_shuffle.1} parent=5 // pred_check
        _
      $region59: #{channel_shuffle.1} parent=5 // pred_check_branch
        %188 = sbr.rel (%p185) target = $region61
      $region60: #{channel_shuffle.1} parent=5 // pred_region
        %s189 = ssub.s32 %s7, 1
        %s190 = sand.u32 %s52, 1
        %s191 = sand.u32 %s52, 1
        %s192 = smul.addr %s191, 8
        %s193 = scalar_lea.vmem [#allocation2], %s192
        // Predicated region
        $region62: #{channel_shuffle.1} parent=60 // pred_check
          %p194 = pneg %p65
        $region63: #{channel_shuffle.1} parent=60 // pred_check_branch
          %196 = sbr.rel (%p194) target = $region65
        $region64: #{channel_shuffle.1} parent=60 // pred_region
          _
        $region65: #{channel_shuffle.1} parent=60 // pred_fallthru
          _
        %s197 = sand.u32 %s52, 1
        %s198 = sand.u32 %s52, 1
        %s199 = smul.addr %s198, 8
        %s200 = scalar_lea.vmem [#allocation2], %s199
        %p201 = pneg %p65
        %p202 = pneg %p62
        %p203 = pneg %p97
        %p204 = pneg %p94
        %s205 = sand.u32 %s84, 1
        %s206 = sand.u32 %s84, 1
        %s207 = smul.addr %s206, 8
        %s208 = scalar_lea.vmem [#allocation3], %s207
        %s209 = smul.u32 2, %s18
        %s210 = smul.u32 2, %s20
        %s211 = smul.u32 2, %s18
        %s212 = smul.u32 2, %s20
        %v213 = vld [vmem:[%s193] sm:$0x3]
        %v214 = vld [vmem:[%s193 + $0x2] sm:$0x3]
        %v215 = vld [vmem:[%s193 + $0x4] sm:$0x3]
        %v216 = vld [vmem:[%s193 + $0x6] sm:$0x3]
        %217 = vst [vmem:[%s208] sm:$0x3] %v213
        %218 = vst [vmem:[%s208 + $0x2] sm:$0x3] %v214
        %219 = vst [vmem:[%s208 + $0x4] sm:$0x3] %v215
        %220 = vst [vmem:[%s208 + $0x6] sm:$0x3] %v216
        %s221 = sand.u32 %s84, 1
        %s222 = sand.u32 %s84, 1
        %s223 = smul.addr %s222, 8
        %s224 = scalar_lea.vmem [#allocation3], %s223
        // Predicated region
        $region66: #{channel_shuffle.1} parent=60 // pred_check
          %p225 = pneg %p94
        $region67: #{channel_shuffle.1} parent=60 // pred_check_branch
          %227 = sbr.rel (%p225) target = $region69
        $region68: #{channel_shuffle.1} parent=60 // pred_region
          %s228 = smul.u32 2, %s18
          %s229 = smul.u32 2, %s20
          %s230 = sadd.s32 %s21, %s19
          %s231 = smul.addr %s229, 2
          %s232 = sadd.s32 %s230, %s231
          %s233 = smul.addr %s228, 4
          %s234 = sadd.s32 %s232, %s233
          %s235 = smul.addr %s234, 2
          %s236 = scalar_lea.vmem %s1, %s235
          // Predicated region
          $region70: #{channel_shuffle.1} parent=68 // pred_check
            _
          $region71: #{channel_shuffle.1} parent=68 // pred_check_branch
            %238 = sbr.rel (0) target = $region73
          $region72: #{channel_shuffle.1} parent=68 // pred_region
            // Predicated region
            $region74: #{channel_shuffle.1} parent=72 // pred_check
              _
            $region75: #{channel_shuffle.1} parent=72 // pred_check_branch
              %240 = sbr.rel target = $region77
            $region76: #{channel_shuffle.1} parent=72 // pred_region
              // Predicated region
              $region89: #{channel_shuffle.1} parent=76 // pred_check
                _
              $region90: #{channel_shuffle.1} parent=76 // pred_check_branch
                %261 = sbr.rel (0) target = $region92
              $region91: #{channel_shuffle.1} parent=76 // pred_region
                loop: start=0, step=1, limit=1
                $region93: #{channel_shuffle.1} parent=91 // loop_pre_header
                  _
                $region94: #{channel_shuffle.1} parent=91 // loop_header
                  %s263 = sphi 0, %s267
                  %p264 = scmp.ge.s32.totalorder %s263, 1
                  %s268 = sphi %s224, %s224
                  %s269 = sphi %s236, %s236
                $region95: #{channel_shuffle.1} parent=91 // loop_header_branch
                  %266 = sbr.rel (%p264) target = $region99
                $region96: #{channel_shuffle.1} parent=91 // loop_body
                  _
                $region97: #{channel_shuffle.1} parent=91 // loop_footer
                  %s267 = sadd.s32 1, %s263
                $region98: #{channel_shuffle.1} parent=91 // loop_footer_branch
                  %262 = sbr.rel target = $region94
                $region99: #{channel_shuffle.1} parent=91 // loop_exit
                  _
                loop: start=0, step=1, limit=1
                $region100: #{channel_shuffle.1} parent=91 // loop_pre_header
                  _
                $region101: #{channel_shuffle.1} parent=91 // loop_header
                  %s272 = sphi 0, %s276
                  %p273 = scmp.ge.s32.totalorder %s272, 1
                  %s277 = sphi %s224, %s224
                  %s278 = sphi %s236, %s236
                $region102: #{channel_shuffle.1} parent=91 // loop_header_branch
                  %275 = sbr.rel (%p273) target = $region106
                $region103: #{channel_shuffle.1} parent=91 // loop_body
                  %v279 = vld [vmem:[%s277] sm:$0x3]
                  %280 = vst [vmem:[%s278] sm:$0x3] %v279
                  %v281 = vld [vmem:[%s277 + $0x2] sm:$0x3]
                  %282 = vst [vmem:[%s278 + $0x4] sm:$0x3] %v281
                  %v283 = vld [vmem:[%s277 + $0x4] sm:$0x3]
                  %284 = vst [vmem:[%s278 + $0x8] sm:$0x3] %v283
                  %v285 = vld [vmem:[%s277 + $0x6] sm:$0x3]
                  %286 = vst [vmem:[%s278 + $0xc] sm:$0x3] %v285
                $region104: #{channel_shuffle.1} parent=91 // loop_footer
                  %s276 = sadd.s32 1, %s272
                $region105: #{channel_shuffle.1} parent=91 // loop_footer_branch
                  %271 = sbr.rel target = $region101
                $region106: #{channel_shuffle.1} parent=91 // loop_exit
                  _
              $region92: #{channel_shuffle.1} parent=76 // pred_fallthru
                _
            $region77: #{channel_shuffle.1} parent=72 // pred_fallthru
              _
            // Predicated region
            $region78: #{channel_shuffle.1} parent=72 // pred_check
              _
            $region79: #{channel_shuffle.1} parent=72 // pred_check_branch
              %242 = sbr.rel (0) target = $region81
            $region80: #{channel_shuffle.1} parent=72 // pred_region
              loop: start=0, step=1, limit=1
              $region82: #{channel_shuffle.1} parent=80 // loop_pre_header
                _
              $region83: #{channel_shuffle.1} parent=80 // loop_header
                %s245 = sphi 0, %s249
                %p246 = scmp.ge.s32.totalorder %s245, 1
                %s250 = sphi %s224, %s224
                %s251 = sphi %s236, %s236
              $region84: #{channel_shuffle.1} parent=80 // loop_header_branch
                %248 = sbr.rel (%p246) target = $region88
              $region85: #{channel_shuffle.1} parent=80 // loop_body
                %v252 = vld [vmem:[%s250] sm:$0x3]
                %253 = vst [vmem:[%s251] sm:$0x3] %v252
                %v254 = vld [vmem:[%s250 + $0x2] sm:$0x3]
                %255 = vst [vmem:[%s251 + $0x4] sm:$0x3] %v254
                %v256 = vld [vmem:[%s250 + $0x4] sm:$0x3]
                %257 = vst [vmem:[%s251 + $0x8] sm:$0x3] %v256
                %v258 = vld [vmem:[%s250 + $0x6] sm:$0x3]
                %259 = vst [vmem:[%s251 + $0xc] sm:$0x3] %v258
              $region86: #{channel_shuffle.1} parent=80 // loop_footer
                %s249 = sadd.s32 1, %s245
              $region87: #{channel_shuffle.1} parent=80 // loop_footer_branch
                %244 = sbr.rel target = $region83
              $region88: #{channel_shuffle.1} parent=80 // loop_exit
                _
            $region81: #{channel_shuffle.1} parent=72 // pred_fallthru
              _
          $region73: #{channel_shuffle.1} parent=68 // pred_fallthru
            _
          %287 = vnop
        $region69: #{channel_shuffle.1} parent=60 // pred_fallthru
          _
      $region61: #{channel_shuffle.1} parent=5 // pred_fallthru
        _
      %p288 = scmp.le.s32.totalorder 2, %s7
      // Predicated region
      $region107: #{channel_shuffle.1} parent=5 // pred_check
        %p289 = pneg %p288
      $region108: #{channel_shuffle.1} parent=5 // pred_check_branch
        %291 = sbr.rel (%p289) target = $region110
      $region109: #{channel_shuffle.1} parent=5 // pred_region
        %s292 = ssub.s32 %s7, 2
        // Predicated region
        $region111: #{channel_shuffle.1} parent=109 // pred_check
          %p293 = pneg %p100
        $region112: #{channel_shuffle.1} parent=109 // pred_check_branch
          %295 = sbr.rel (%p293) target = $region114
        $region113: #{channel_shuffle.1} parent=109 // pred_region
          %s296 = sand.u32 %s85, 1
          %s297 = sand.u32 %s85, 1
          %s298 = smul.addr %s297, 8
          %s299 = scalar_lea.vmem [#allocation3], %s298
        $region114: #{channel_shuffle.1} parent=109 // pred_fallthru
          _
      $region110: #{channel_shuffle.1} parent=5 // pred_fallthru
        _
    $region6: #{channel_shuffle.1} parent=1 // loop_footer
      %s11 = sadd.s32 1, %s7
    $region7: #{channel_shuffle.1} parent=1 // loop_footer_branch
      %6 = sbr.rel target = $region3
    $region8: #{channel_shuffle.1} parent=1 // loop_exit
      _

</llo_original>
